<compile_context>
chip_gen: v5e
topology: v5e:2x2
jax: 0.10.0
libtpu: 0.0.40
codegen_flags: <defaults>
</compile_context>

<pallas_src>
import jax
import jax.numpy as jnp
from jax.experimental import pallas as pl
from jax.experimental.pallas import tpu as pltpu


def _lintrans_kernel(x_ref, w_ref, b_ref, o_ref):
    """x_ref: [tm, d0], w_ref: [d0, d_out], b_ref: [1, d_out], o_ref: [tm, d_out]."""
    # Single fused affine layer (chain collapsed in the wrapper).
    h = jnp.dot(x_ref[...], w_ref[...],
                preferred_element_type=jnp.float32) + b_ref[...]

    # scale():   z = (h - zmin) / (zmax - zmin)          (per row, dim=1)
    # normalize: out = z / max(||z||_2, 1e-12)           (per row, dim=1)
    # Folded:    out = (h - zmin) * rsqrt(sum((h - zmin)^2))
    # (range factor cancels; eps clamp never binds since ||z|| >= 1 for any
    #  non-constant row; constant rows are NaN in both forms, like PyTorch).
    zmin = jnp.min(h, axis=1, keepdims=True)
    d = h - zmin
    sumsq = jnp.sum(d * d, axis=1, keepdims=True)
    o_ref[...] = (d * jax.lax.rsqrt(sumsq)).astype(o_ref.dtype)


def lintrans_forward(x, weights, biases, *, tm=4096, vmem_limit_bytes=None):
    """x: [N, dims[0]]   weights[i]: [dims[i], dims[i+1]]   biases[i]: [dims[i+1]]

    Weights are stored [in_features, out_features], i.e. torch_weight.T, so the
    math is x @ W + b (== PyTorch x @ W_t.T + b).

    tm guidance: HBM-bound kernel -> biggest tile that fits VMEM.
      v7x  (64 MiB VMEM): tm <= ~8192
      v6e/v5e (128 MiB):  tm up to ~16384 with vmem_limit_bytes raised.
    tm is clamped to N (single full-extent block) for small inputs, and to a
    multiple of 8 sublanes otherwise; the ragged tail block is masked by
    Pallas (no host-side pad/slice, no extra HBM pass over x).
    """
    N, d0 = x.shape
    d_out = weights[-1].shape[1]

    # --- Collapse the affine chain offline (exact: no intermediate nonlinearity).
    w_eff = weights[0]
    b_eff = biases[0]
    for w, b in zip(weights[1:], biases[1:]):
        w_eff = w_eff @ w
        b_eff = b_eff @ w + b
    b_eff = b_eff.reshape(1, d_out)

    # --- Row tiling.
    if tm >= N:
        tm = N                      # one full-extent block (always legal)
    else:
        tm = max(8, (tm // 8) * 8)  # sublane-aligned tile; tail is masked
    grid = (pl.cdiv(N, tm),)

    cost = pl.CostEstimate(
        flops=2 * N * d0 * d_out + 6 * N * d_out,
        transcendentals=N,                                   # one rsqrt per row
        bytes_accessed=4 * (N * (d0 + d_out) + d0 * d_out + d_out),
    )

    return pl.pallas_call(
        _lintrans_kernel,
        out_shape=jax.ShapeDtypeStruct((N, d_out), x.dtype),
        grid=grid,
        in_specs=[
            pl.BlockSpec((tm, d0), lambda i: (i, 0)),
            # Constant index_maps -> weight/bias stay resident in VMEM.
            pl.BlockSpec(w_eff.shape, lambda i: (0, 0)),
            pl.BlockSpec((1, d_out), lambda i: (0, 0)),
        ],
        out_specs=pl.BlockSpec((tm, d_out), lambda i: (i, 0)),
        compiler_params=pltpu.CompilerParams(
            dimension_semantics=("parallel",),   # shard row tiles across TCs (v7x)
            vmem_limit_bytes=vmem_limit_bytes,
        ),
        cost_estimate=cost,
    )(x, w_eff, b_eff)


def _init_linear_params(key, dims):
    """Deterministic nn.Linear-style init: U(-1/sqrt(fan_in), 1/sqrt(fan_in))."""
    weights, biases = [], []
    for i in range(len(dims) - 1):
        key, wk, bk = jax.random.split(key, 3)
        bound = 1.0 / jnp.sqrt(jnp.float32(dims[i]))
        w = jax.random.uniform(wk, (dims[i], dims[i + 1]), jnp.float32, -bound, bound)
        b = jax.random.uniform(bk, (dims[i + 1],), jnp.float32, -bound, bound)
        weights.append(w)
        biases.append(b)
    return weights, biases


def _reference(x, weights, biases):
    """Faithful (un-fused) emulation of the PyTorch forward."""
    h = x
    for w, b in zip(weights, biases):
        h = h @ w + b
    zmax = jnp.max(h, axis=1, keepdims=True)
    zmin = jnp.min(h, axis=1, keepdims=True)
    z = (h - zmin) / (zmax - zmin)
    norm = jnp.sqrt(jnp.sum(z * z, axis=1, keepdims=True))
    return z / jnp.maximum(norm, 1e-12)


if __name__ == "__main__":
    # LinTrans(layers=2, dims=[32, 64, 16]).  N=300 deliberately exercises both
    # the ragged-tail path (tm=128 -> grid=3, last block masked) and the
    # single full-extent block path (default tm clamps to N).
    dims = [32, 64, 16]
    N = 300

    key = jax.random.PRNGKey(0)
    key, xk = jax.random.split(key)
    x = jax.random.normal(xk, (N, dims[0]), jnp.float32)
    weights, biases = _init_linear_params(key, dims)

    ref = _reference(x, weights, biases)

    out_tiled = jax.block_until_ready(lintrans_forward(x, weights, biases, tm=128))
    out_single = jax.block_until_ready(lintrans_forward(x, weights, biases))

    for out in (out_tiled, out_single):
        assert out.shape == (N, dims[-1])
        assert jnp.allclose(out, ref, atol=1e-5, rtol=1e-5), "mismatch vs reference"

    print("KERNEL_OK")
</pallas_src>

<mosaic_0001>
module attributes {stable_mosaic.version = 11 : i64} {
  func.func @_lintrans_kernel(%arg0: i32, %arg1: memref<128x32xf32, #tpu.memory_space<vmem>>, %arg2: memref<32x16xf32, #tpu.memory_space<vmem>>, %arg3: memref<1x16xf32, #tpu.memory_space<vmem>>, %arg4: memref<128x16xf32, #tpu.memory_space<vmem>>) attributes {dimension_semantics = [#tpu.dimension_semantics<parallel>], iteration_bounds = array<i64: 3>, scalar_prefetch = 0 : i64, scratch_operands = 0 : i64, tpu.core_type = #tpu.core_type<tc>, window_params = [{transform_indices = @transform_0, window_bounds = array<i64: 128, 32>}, {pipeline_mode = #tpu.pipeline_mode<synchronous>, transform_indices = @transform_1, window_bounds = array<i64: 32, 16>}, {pipeline_mode = #tpu.pipeline_mode<synchronous>, transform_indices = @transform_2, window_bounds = array<i64: 1, 16>}, {transform_indices = @transform_3, window_bounds = array<i64: 128, 16>}]} {
    %c0 = arith.constant 0 : index
    %c0_0 = arith.constant 0 : index
    %0 = vector.load %arg1[%c0, %c0_0] : memref<128x32xf32, #tpu.memory_space<vmem>>, vector<128x32xf32>
    %c0_1 = arith.constant 0 : index
    %c0_2 = arith.constant 0 : index
    %1 = vector.load %arg2[%c0_1, %c0_2] : memref<32x16xf32, #tpu.memory_space<vmem>>, vector<32x16xf32>
    %cst = arith.constant dense<0.000000e+00> : vector<128x16xf32>
    %2 = tpu.matmul %0, %1, %cst {dimension_numbers = #tpu.dot_dimension_numbers<[1], [0], [0], [1], [0, 0, 1, 1], [], []>} : vector<128x32xf32>, vector<32x16xf32>, vector<128x16xf32> -> vector<128x16xf32>
    %c0_3 = arith.constant 0 : index
    %c0_4 = arith.constant 0 : index
    %3 = vector.load %arg3[%c0_3, %c0_4] : memref<1x16xf32, #tpu.memory_space<vmem>>, vector<1x16xf32>
    %4 = vector.broadcast %3 : vector<1x16xf32> to vector<128x16xf32>
    %5 = arith.addf %2, %4 : vector<128x16xf32>
    %cst_5 = arith.constant dense<0x7F800000> : vector<128xf32>
    %6 = vector.multi_reduction <minimumf>, %5, %cst_5 [1] : vector<128x16xf32> to vector<128xf32>
    %7 = vector.shape_cast %6 : vector<128xf32> to vector<128x1xf32>
    %8 = vector.broadcast %7 : vector<128x1xf32> to vector<128x16xf32>
    %9 = arith.subf %5, %8 : vector<128x16xf32>
    %10 = arith.mulf %9, %9 : vector<128x16xf32>
    %cst_6 = arith.constant dense<0.000000e+00> : vector<128xf32>
    %11 = vector.multi_reduction <add>, %10, %cst_6 [1] : vector<128x16xf32> to vector<128xf32>
    %12 = vector.shape_cast %11 : vector<128xf32> to vector<128x1xf32>
    %13 = math.rsqrt %12 : vector<128x1xf32>
    %14 = vector.broadcast %13 : vector<128x1xf32> to vector<128x16xf32>
    %15 = arith.mulf %9, %14 : vector<128x16xf32>
    %c0_7 = arith.constant 0 : index
    %c0_8 = arith.constant 0 : index
    %16 = vector.load %arg4[%c0_7, %c0_8] : memref<128x16xf32, #tpu.memory_space<vmem>>, vector<128x16xf32>
    tpu.vector_store %arg4[%c0_7, %c0_8], %15 {strides = array<i32>} : memref<128x16xf32, #tpu.memory_space<vmem>>, vector<128x16xf32>,
    return
  }
  func.func @transform_0(%arg0: i32) -> (i32, i32) {
    %c0_i32 = arith.constant 0 : i32
    %c0_i32_0 = arith.constant 0 : i32
    return %arg0, %c0_i32 : i32, i32
  }
  func.func @transform_1(%arg0: i32) -> (i32, i32) {
    %c0_i32 = arith.constant 0 : i32
    %c0_i32_0 = arith.constant 0 : i32
    %c0_i32_1 = arith.constant 0 : i32
    return %c0_i32, %c0_i32_0 : i32, i32
  }
  func.func @transform_2(%arg0: i32) -> (i32, i32) {
    %c0_i32 = arith.constant 0 : i32
    %c0_i32_0 = arith.constant 0 : i32
    %c0_i32_1 = arith.constant 0 : i32
    return %c0_i32, %c0_i32_0 : i32, i32
  }
  func.func @transform_3(%arg0: i32) -> (i32, i32) {
    %c0_i32 = arith.constant 0 : i32
    %c0_i32_0 = arith.constant 0 : i32
    return %arg0, %c0_i32 : i32, i32
  }
}

</mosaic_0001>

<llo_original>
// kernel: tpu_custom_call.1
$region0: #{tpu_custom_call.1}
  #allocation0 [shape = 'u32[]', space=smem, size = 0x4, offset = 0x4, fixed_abs, tag = 'smem constant byte address 0x4 - core index']
  #allocation1 [shape = 'u32[72,128]{1,0:T(1,128)}', space=vmem, size = 0x9000, scoped, tag = 'internal scratch']
  %s0 = inlined_call_operand.vmem [shape: f32[300,32], index: 0, kind: input, shape index: {}]
  %s1 = inlined_call_operand.vmem [shape: f32[32,16], index: 1, kind: input, shape index: {}]
  %s2 = inlined_call_operand.vmem [shape: f32[1,16], index: 2, kind: input, shape index: {}]
  %s3 = inlined_call_operand.vmem [shape: f32[300,16], index: 3, kind: output, shape index: {}]
  %s4 = sld [smem:[#allocation0]]
  $region93: #{tpu_custom_call.1} parent=0
    _
  %s6 = ssub.s32 1, %s4
  %s7 = scalar_select 0, %s6, %s4
  $region1: #{tpu_custom_call.1} parent=0
    #allocation2 [shape = 'u8[131072]{0}', space=vmem, size = 0x20000, scoped, tag = 'output window, operand 0']
    loop: start=0, step=1, limit=5
    $region2: #{tpu_custom_call.1} parent=1 // loop_pre_header
      _
    $region3: #{tpu_custom_call.1} parent=1 // loop_header
      %s9 = sphi 0, %s13
      %p10 = scmp.ge.s32.totalorder %s9, 5
      %s19 = sphi 0, %s21
      %s22 = sphi 0, %s19
      %s23 = sphi 0, %s22
      %s39 = sphi 0, %s23
      %s43 = sphi 0, %s43
      %s45 = sphi 0, %s43
      %s46 = sphi 0, %s45
      %s60 = sphi 0, %s46
      %s64 = sphi 0, %s64
      %s66 = sphi 0, %s64
      %s67 = sphi 0, %s66
      %s81 = sphi 0, %s67
      %s87 = sphi 0, %s89
      %s90 = sphi 0, %s87
      %s91 = sphi 0, %s90
      %s107 = sphi 0, %s91
    $region4: #{tpu_custom_call.1} parent=1 // loop_header_branch
      %12 = sbr.rel (%p10) target = $region8
    $region5: #{tpu_custom_call.1} parent=1 // loop_body
      %s14 = ssub.s32 %s9, 1
      %s15 = ssub.s32 %s9, 2
      %s16 = sadd.s32 %s9, 1
      %s17 = ssub.s32 %s9, %s16
      %p18 = scmp.eq.s32.totalorder %s17, 0
      %s20 = sadd.s32 %s19, 1
      %s21 = scalar_select %p18, %s19, %s20
      %p24 = pneg %p18
      %p25 = scmp.eq.s32.totalorder %s9, 2
      %p26 = por %p24, %p25
      %p27 = scmp.ne.s32.totalorder %s19, %s22
      %p28 = scmp.eq.s32.totalorder %s9, 0
      %p29 = por %p27, %p28
      %p30 = scmp.ne.s32.totalorder %s19, %s22
      %p31 = scmp.eq.s32.totalorder %s14, 2
      %p32 = por %p30, %p31
      %p33 = scmp.ne.s32.totalorder %s22, %s23
      %p34 = scmp.eq.s32.totalorder %s14, 0
      %p35 = por %p33, %p34
      %p36 = scmp.ne.s32.totalorder %s22, %s23
      %p37 = scmp.eq.s32.totalorder %s15, 2
      %p38 = por %p36, %p37
      %p40 = scmp.ne.s32.totalorder %s23, %s39
      %p41 = scmp.eq.s32.totalorder %s15, 0
      %p42 = por %p40, %p41
      %s44 = sadd.s32 %s43, 1
      %p47 = scmp.eq.s32.totalorder %s9, 2
      %p48 = scmp.ne.s32.totalorder %s43, %s45
      %p49 = scmp.eq.s32.totalorder %s9, 0
      %p50 = por %p48, %p49
      %p51 = scmp.ne.s32.totalorder %s43, %s45
      %p52 = scmp.eq.s32.totalorder %s14, 2
      %p53 = por %p51, %p52
      %p54 = scmp.ne.s32.totalorder %s45, %s46
      %p55 = scmp.eq.s32.totalorder %s14, 0
      %p56 = por %p54, %p55
      %p57 = scmp.ne.s32.totalorder %s45, %s46
      %p58 = scmp.eq.s32.totalorder %s15, 2
      %p59 = por %p57, %p58
      %p61 = scmp.ne.s32.totalorder %s46, %s60
      %p62 = scmp.eq.s32.totalorder %s15, 0
      %p63 = por %p61, %p62
      %s65 = sadd.s32 %s64, 1
      %p68 = scmp.eq.s32.totalorder %s9, 2
      %p69 = scmp.ne.s32.totalorder %s64, %s66
      %p70 = scmp.eq.s32.totalorder %s9, 0
      %p71 = por %p69, %p70
      %p72 = scmp.ne.s32.totalorder %s64, %s66
      %p73 = scmp.eq.s32.totalorder %s14, 2
      %p74 = por %p72, %p73
      %p75 = scmp.ne.s32.totalorder %s66, %s67
      %p76 = scmp.eq.s32.totalorder %s14, 0
      %p77 = por %p75, %p76
      %p78 = scmp.ne.s32.totalorder %s66, %s67
      %p79 = scmp.eq.s32.totalorder %s15, 2
      %p80 = por %p78, %p79
      %p82 = scmp.ne.s32.totalorder %s67, %s81
      %p83 = scmp.eq.s32.totalorder %s15, 0
      %p84 = por %p82, %p83
      %s85 = ssub.s32 %s9, %s16
      %p86 = scmp.eq.s32.totalorder %s85, 0
      %s88 = sadd.s32 %s87, 1
      %s89 = scalar_select %p86, %s87, %s88
      %p92 = pneg %p86
      %p93 = scmp.eq.s32.totalorder %s9, 2
      %p94 = por %p92, %p93
      %p95 = scmp.ne.s32.totalorder %s87, %s90
      %p96 = scmp.eq.s32.totalorder %s9, 0
      %p97 = por %p95, %p96
      %p98 = scmp.ne.s32.totalorder %s87, %s90
      %p99 = scmp.eq.s32.totalorder %s14, 2
      %p100 = por %p98, %p99
      %p101 = scmp.ne.s32.totalorder %s90, %s91
      %p102 = scmp.eq.s32.totalorder %s14, 0
      %p103 = por %p101, %p102
      %p104 = scmp.ne.s32.totalorder %s90, %s91
      %p105 = scmp.eq.s32.totalorder %s15, 2
      %p106 = por %p104, %p105
      %p108 = scmp.ne.s32.totalorder %s91, %s107
      %p109 = scmp.eq.s32.totalorder %s15, 0
      %p110 = por %p108, %p109
      %p111 = scmp.le.s32.totalorder 1, %s9
      %p112 = scmp.lt.s32.totalorder %s9, 4
      %p113 = pnand %p111, %p112
      %p114 = pneg %p113
      // Predicated region
      $region9: #{tpu_custom_call.1} parent=5 // pred_check
        _
      $region10: #{tpu_custom_call.1} parent=5 // pred_check_branch
        %116 = sbr.rel (%p113) target = $region12
      $region11: #{tpu_custom_call.1} parent=5 // pred_region
        %s117 = ssub.s32 %s9, 1
        // Predicated region
        $region13: #{tpu_custom_call.1} parent=11 // pred_check
          %p118 = pneg %p56
        $region14: #{tpu_custom_call.1} parent=11 // pred_check_branch
          %120 = sbr.rel (%p118) target = $region16
        $region15: #{tpu_custom_call.1} parent=11 // pred_region
          _
        $region16: #{tpu_custom_call.1} parent=11 // pred_fallthru
          _
        // Predicated region
        $region17: #{tpu_custom_call.1} parent=11 // pred_check
          %p121 = pneg %p77
        $region18: #{tpu_custom_call.1} parent=11 // pred_check_branch
          %123 = sbr.rel (%p121) target = $region20
        $region19: #{tpu_custom_call.1} parent=11 // pred_region
          _
        $region20: #{tpu_custom_call.1} parent=11 // pred_fallthru
          _
      $region12: #{tpu_custom_call.1} parent=5 // pred_fallthru
        _
      %p124 = scmp.lt.s32.totalorder %s9, 3
      // Predicated region
      $region21: #{tpu_custom_call.1} parent=5 // pred_check
        %p125 = pneg %p124
      $region22: #{tpu_custom_call.1} parent=5 // pred_check_branch
        %127 = sbr.rel (%p125) target = $region24
      $region23: #{tpu_custom_call.1} parent=5 // pred_region
        // Predicated region
        $region25: #{tpu_custom_call.1} parent=23 // pred_check
          %p128 = pneg %p29
        $region26: #{tpu_custom_call.1} parent=23 // pred_check_branch
          %130 = sbr.rel (%p128) target = $region28
        $region27: #{tpu_custom_call.1} parent=23 // pred_region
          %s131 = smul.u32 16, %s9
          %s132 = ssub.s32 38, %s131
          %p133 = scmp.lt.s32.totalorder %s132, 16
          %s134 = scalar_select %p133, %s132, 16
          %s135 = smul.u32 8, %s134
          %p136 = scmp.lt.s32.totalorder %s131, 37
          %s137 = scalar_select %p136, %s131, 37
          %s138 = smul.addr %s137, 8
          %s139 = scalar_lea.vmem %s0, %s138
          %s140 = smul.u32 16, %s9
          %s141 = ssub.s32 38, %s140
          %p142 = scmp.lt.s32.totalorder %s141, 16
          %s143 = scalar_select %p142, %s141, 16
          %s144 = smul.u32 8, %s143
        $region28: #{tpu_custom_call.1} parent=23 // pred_fallthru
          _
      $region24: #{tpu_custom_call.1} parent=5 // pred_fallthru
        _
      %p145 = scmp.le.s32.totalorder 1, %s9
      %p146 = scmp.lt.s32.totalorder %s9, 4
      %p147 = pnand %p145, %p146
      %p148 = pneg %p147
      // Predicated region
      $region29: #{tpu_custom_call.1} parent=5 // pred_check
        _
      $region30: #{tpu_custom_call.1} parent=5 // pred_check_branch
        %150 = sbr.rel (%p147) target = $region32
      $region31: #{tpu_custom_call.1} parent=5 // pred_region
        %s151 = ssub.s32 %s9, 1
        %s152 = smul.u32 16, %s14
        %s153 = ssub.s32 38, %s152
        %p154 = scmp.lt.s32.totalorder %s153, 16
        %s155 = scalar_select %p154, %s153, 16
        %s156 = smul.u32 8, %s155
        %p157 = scmp.lt.s32.totalorder %s152, 37
        %s158 = scalar_select %p157, %s152, 37
        %s159 = smul.addr %s158, 8
        %s160 = scalar_lea.vmem %s0, %s159
        %p161 = pneg %p35
        %p162 = pneg %p32
        %p163 = pneg %p56
        %p164 = pneg %p53
        %p165 = pneg %p77
        %p166 = pneg %p74
        %p167 = pneg %p103
        %p168 = pneg %p100
        %s169 = sand.u32 %s90, 1
        %s170 = sand.u32 %s90, 1
        %s171 = smul.addr %s170, 128
        %s172 = scalar_lea.vmem [#allocation2], %s171
        %s173 = smul.u32 16, %s14
        %s174 = ssub.s32 38, %s173
        %p175 = scmp.lt.s32.totalorder %s174, 16
        %s176 = scalar_select %p175, %s174, 16
        %s177 = smul.u32 8, %s176
        %p178 = scmp.lt.s32.totalorder %s173, 37
        %s179 = scalar_select %p178, %s173, 37
        %s180 = smul.addr %s179, 8
        %s181 = scalar_lea.vmem %s0, %s180
        %s182 = smul.u32 16, %s14
        %s183 = ssub.s32 38, %s182
        %p184 = scmp.lt.s32.totalorder %s183, 16
        %s185 = scalar_select %p184, %s183, 16
        %s186 = smul.u32 8, %s185
        %s187 = smul.u32 16, %s14
        %s188 = ssub.s32 38, %s187
        %p189 = scmp.lt.s32.totalorder %s188, 16
        %s190 = scalar_select %p189, %s188, 16
        %s191 = smul.u32 8, %s190
        %v192 = vld [vmem:[%s181] sm:$0xff]
        %v193 = vld [vmem:[%s181 + $0x8] sm:$0xff]
        %v194 = vld [vmem:[%s181 + $0x10] sm:$0xff]
        %v195 = vld [vmem:[%s181 + $0x18] sm:$0xff]
        %v196 = vld [vmem:[%s181 + $0x20] sm:$0xff]
        %v197 = vld [vmem:[%s181 + $0x28] sm:$0xff]
        %v198 = vld [vmem:[%s181 + $0x30] sm:$0xff]
        %v199 = vld [vmem:[%s181 + $0x38] sm:$0xff]
        %v200 = vld [vmem:[%s181 + $0x40] sm:$0xff]
        %v201 = vld [vmem:[%s181 + $0x48] sm:$0xff]
        %v202 = vld [vmem:[%s181 + $0x50] sm:$0xff]
        %v203 = vld [vmem:[%s181 + $0x58] sm:$0xff]
        %v204 = vld [vmem:[%s181 + $0x60] sm:$0xff]
        %v205 = vld [vmem:[%s181 + $0x68] sm:$0xff]
        %v206 = vld [vmem:[%s181 + $0x70] sm:$0xff]
        %v207 = vld [vmem:[%s181 + $0x78] sm:$0xff]
        %v208 = vld [vmem:[%s1] sm:$0xff]
        %v209 = vld [vmem:[%s1 + $0x8] sm:$0xff]
        %v210 = vld [vmem:[%s1 + $0x10] sm:$0xff]
        %v211 = vld [vmem:[%s1 + $0x18] sm:$0xff]
        %v212 = vld [vmem:[%s2] sm:$0x1]
        %v214 = vperm.slane %v212, 0
        %vm216 = vcmask 261120
        %v218 = vsel %vm216, %v192, 0
        %v221 = vsel %vm216, %v193, 0
        %v224 = vsel %vm216, %v194, 0
        %v227 = vsel %vm216, %v195, 0
        %v230 = vsel %vm216, %v196, 0
        %v233 = vsel %vm216, %v197, 0
        %v236 = vsel %vm216, %v198, 0
        %v239 = vsel %vm216, %v199, 0
        %v242 = vsel %vm216, %v200, 0
        %v245 = vsel %vm216, %v201, 0
        %v248 = vsel %vm216, %v202, 0
        %v251 = vsel %vm216, %v203, 0
        %v254 = vsel %vm216, %v204, 0
        %v257 = vsel %vm216, %v205, 0
        %v260 = vsel %vm216, %v206, 0
        %v263 = vsel %vm216, %v207, 0
        %265 = vmatpush.msra.mxu0 0.0
        %266 = vmatpush.msra.mxu0 0.0
        %267 = vmatpush.msra.mxu0 0.0
        %268 = vmatpush.msra.mxu0 0.0
        %269 = vmatpush.msra.mxu0 0.0
        %270 = vmatpush.msra.mxu0 0.0
        %271 = vmatpush.msra.mxu0 0.0
        %272 = vmatpush.msra.mxu0 0.0
        %273 = vmatpush.msra.mxu0 0.0
        %274 = vmatpush.msra.mxu0 0.0
        %275 = vmatpush.msra.mxu0 0.0
        %276 = vmatpush.msra.mxu0 0.0
        %277 = vmatpush.msra.mxu0 %v211
        %278 = vmatpush.msra.mxu0 %v210
        %279 = vmatpush.msra.mxu0 %v209
        %280 = vmatpush.msra.mxu0 %v208
        %281 = vmatmul.f32.gmra.mxu0 %v218
        %v282 = vpop.f32.mrf.mxu0
        %v283 = vadd.f32 %v214, %v282
        %284 = vmatmul.f32.gmra.mxu0 %v221
        %v285 = vpop.f32.mrf.mxu0
        %v286 = vadd.f32 %v214, %v285
        %287 = vmatmul.f32.gmra.mxu0 %v224
        %v288 = vpop.f32.mrf.mxu0
        %v289 = vadd.f32 %v214, %v288
        %290 = vmatmul.f32.gmra.mxu0 %v227
        %v291 = vpop.f32.mrf.mxu0
        %v292 = vadd.f32 %v214, %v291
        %293 = vmatmul.f32.gmra.mxu0 %v230
        %v294 = vpop.f32.mrf.mxu0
        %v295 = vadd.f32 %v214, %v294
        %296 = vmatmul.f32.gmra.mxu0 %v233
        %v297 = vpop.f32.mrf.mxu0
        %v298 = vadd.f32 %v214, %v297
        %299 = vmatmul.f32.gmra.mxu0 %v236
        %v300 = vpop.f32.mrf.mxu0
        %v301 = vadd.f32 %v214, %v300
        %302 = vmatmul.f32.gmra.mxu0 %v239
        %v303 = vpop.f32.mrf.mxu0
        %v304 = vadd.f32 %v214, %v303
        %305 = vmatmul.f32.gmra.mxu0 %v242
        %v306 = vpop.f32.mrf.mxu0
        %v307 = vadd.f32 %v214, %v306
        %308 = vmatmul.f32.gmra.mxu0 %v245
        %v309 = vpop.f32.mrf.mxu0
        %v310 = vadd.f32 %v214, %v309
        %311 = vmatmul.f32.gmra.mxu0 %v248
        %v312 = vpop.f32.mrf.mxu0
        %v313 = vadd.f32 %v214, %v312
        %314 = vmatmul.f32.gmra.mxu0 %v251
        %v315 = vpop.f32.mrf.mxu0
        %v316 = vadd.f32 %v214, %v315
        %317 = vmatmul.f32.gmra.mxu0 %v254
        %v318 = vpop.f32.mrf.mxu0
        %v319 = vadd.f32 %v214, %v318
        %320 = vmatmul.f32.gmra.mxu0 %v257
        %v321 = vpop.f32.mrf.mxu0
        %v322 = vadd.f32 %v214, %v321
        %323 = vmatmul.f32.gmra.mxu0 %v260
        %v324 = vpop.f32.mrf.mxu0
        %v325 = vadd.f32 %v214, %v324
        %326 = vmatmul.f32.gmra.mxu0 %v263
        %v327 = vpop.f32.mrf.mxu0
        %v328 = vadd.f32 %v214, %v327
        %329 = vdwg.mxu0
        %vm330 = vcmask 130048
        %v331 = vsel %vm330, %v283, inf
        %332 = vmin.xlane.f32.xlu0 %v331
        %v333 = vpop.xlane.xlu0 %332
        %v334 = vsel %vm330, %v286, inf
        %335 = vmin.xlane.f32.xlu0 %v334
        %v336 = vpop.xlane.xlu0 %335
        %v337 = vsel %vm330, %v289, inf
        %338 = vmin.xlane.f32.xlu0 %v337
        %v339 = vpop.xlane.xlu0 %338
        %v340 = vsel %vm330, %v292, inf
        %341 = vmin.xlane.f32.xlu0 %v340
        %v342 = vpop.xlane.xlu0 %341
        %v343 = vsel %vm330, %v295, inf
        %344 = vmin.xlane.f32.xlu0 %v343
        %v345 = vpop.xlane.xlu0 %344
        %v346 = vsel %vm330, %v298, inf
        %347 = vmin.xlane.f32.xlu0 %v346
        %v348 = vpop.xlane.xlu0 %347
        %v349 = vsel %vm330, %v301, inf
        %350 = vmin.xlane.f32.xlu0 %v349
        %v351 = vpop.xlane.xlu0 %350
        %v352 = vsel %vm330, %v304, inf
        %353 = vmin.xlane.f32.xlu0 %v352
        %v354 = vpop.xlane.xlu0 %353
        %v355 = vsel %vm330, %v307, inf
        %356 = vmin.xlane.f32.xlu0 %v355
        %v357 = vpop.xlane.xlu0 %356
        %v358 = vsel %vm330, %v310, inf
        %359 = vmin.xlane.f32.xlu0 %v358
        %v360 = vpop.xlane.xlu0 %359
        %v361 = vsel %vm330, %v313, inf
        %362 = vmin.xlane.f32.xlu0 %v361
        %v363 = vpop.xlane.xlu0 %362
        %v364 = vsel %vm330, %v316, inf
        %365 = vmin.xlane.f32.xlu0 %v364
        %v366 = vpop.xlane.xlu0 %365
        %v367 = vsel %vm330, %v319, inf
        %368 = vmin.xlane.f32.xlu0 %v367
        %v369 = vpop.xlane.xlu0 %368
        %v370 = vsel %vm330, %v322, inf
        %371 = vmin.xlane.f32.xlu0 %v370
        %v372 = vpop.xlane.xlu0 %371
        %v373 = vsel %vm330, %v325, inf
        %374 = vmin.xlane.f32.xlu0 %v373
        %v375 = vpop.xlane.xlu0 %374
        %v376 = vsel %vm330, %v328, inf
        %377 = vmin.xlane.f32.xlu0 %v376
        %v378 = vpop.xlane.xlu0 %377
        %v379 = vsub.f32 %v283, %v333
        %v380 = vsub.f32 %v286, %v336
        %v381 = vsub.f32 %v289, %v339
        %v382 = vsub.f32 %v292, %v342
        %v383 = vsub.f32 %v295, %v345
        %v384 = vsub.f32 %v298, %v348
        %v385 = vsub.f32 %v301, %v351
        %v386 = vsub.f32 %v304, %v354
        %v387 = vsub.f32 %v307, %v357
        %v388 = vsub.f32 %v310, %v360
        %v389 = vsub.f32 %v313, %v363
        %v390 = vsub.f32 %v316, %v366
        %v391 = vsub.f32 %v319, %v369
        %v392 = vsub.f32 %v322, %v372
        %v393 = vsub.f32 %v325, %v375
        %v394 = vsub.f32 %v328, %v378
        %v395 = vmul.f32 %v379, %v379
        %v396 = vmul.f32 %v380, %v380
        %v397 = vmul.f32 %v381, %v381
        %v398 = vmul.f32 %v382, %v382
        %v399 = vmul.f32 %v383, %v383
        %v400 = vmul.f32 %v384, %v384
        %v401 = vmul.f32 %v385, %v385
        %v402 = vmul.f32 %v386, %v386
        %v403 = vmul.f32 %v387, %v387
        %v404 = vmul.f32 %v388, %v388
        %v405 = vmul.f32 %v389, %v389
        %v406 = vmul.f32 %v390, %v390
        %v407 = vmul.f32 %v391, %v391
        %v408 = vmul.f32 %v392, %v392
        %v409 = vmul.f32 %v393, %v393
        %v410 = vmul.f32 %v394, %v394
        %v411 = vsel %vm330, %v395, 0.0
        %412 = vadd.xlane.f32.xlu0 %v411
        %v413 = vpop.xlane.xlu0 %412
        %v414 = vsel %vm330, %v396, 0.0
        %415 = vadd.xlane.f32.xlu0 %v414
        %v416 = vpop.xlane.xlu0 %415
        %v417 = vsel %vm330, %v397, 0.0
        %418 = vadd.xlane.f32.xlu0 %v417
        %v419 = vpop.xlane.xlu0 %418
        %v420 = vsel %vm330, %v398, 0.0
        %421 = vadd.xlane.f32.xlu0 %v420
        %v422 = vpop.xlane.xlu0 %421
        %v423 = vsel %vm330, %v399, 0.0
        %424 = vadd.xlane.f32.xlu0 %v423
        %v425 = vpop.xlane.xlu0 %424
        %v426 = vsel %vm330, %v400, 0.0
        %427 = vadd.xlane.f32.xlu0 %v426
        %v428 = vpop.xlane.xlu0 %427
        %v429 = vsel %vm330, %v401, 0.0
        %430 = vadd.xlane.f32.xlu0 %v429
        %v431 = vpop.xlane.xlu0 %430
        %v432 = vsel %vm330, %v402, 0.0
        %433 = vadd.xlane.f32.xlu0 %v432
        %v434 = vpop.xlane.xlu0 %433
        %v435 = vsel %vm330, %v403, 0.0
        %436 = vadd.xlane.f32.xlu0 %v435
        %v437 = vpop.xlane.xlu0 %436
        %v438 = vsel %vm330, %v404, 0.0
        %439 = vadd.xlane.f32.xlu0 %v438
        %v440 = vpop.xlane.xlu0 %439
        %v441 = vsel %vm330, %v405, 0.0
        %442 = vadd.xlane.f32.xlu0 %v441
        %v443 = vpop.xlane.xlu0 %442
        %v444 = vsel %vm330, %v406, 0.0
        %445 = vadd.xlane.f32.xlu0 %v444
        %v446 = vpop.xlane.xlu0 %445
        %v447 = vsel %vm330, %v407, 0.0
        %448 = vadd.xlane.f32.xlu0 %v447
        %v449 = vpop.xlane.xlu0 %448
        %v450 = vsel %vm330, %v408, 0.0
        %451 = vadd.xlane.f32.xlu0 %v450
        %v452 = vpop.xlane.xlu0 %451
        %v453 = vsel %vm330, %v409, 0.0
        %454 = vadd.xlane.f32.xlu0 %v453
        %v455 = vpop.xlane.xlu0 %454
        %v456 = vsel %vm330, %v410, 0.0
        %457 = vadd.xlane.f32.xlu0 %v456
        %v458 = vpop.xlane.xlu0 %457
        %v459 = vrsqrt.pop %v413
        %v460 = vmul.f32 %v459, %v413
        %v461 = vmul.f32 %v460, %v459
        %v462 = vmul.f32 0.5, %v461
        %v463 = vsub.f32 1.5, %v462
        %v464 = vmul.f32 %v459, %v463
        %vm465 = vweird.f32 %v413
        %vm466 = vweird.f32 %v459
        %vm467 = vmor %vm465, %vm466
        %v468 = vsel %vm467, %v459, %v464
        %v469 = vrsqrt.pop %v416
        %v470 = vmul.f32 %v469, %v416
        %v471 = vmul.f32 %v470, %v469
        %v472 = vmul.f32 0.5, %v471
        %v473 = vsub.f32 1.5, %v472
        %v474 = vmul.f32 %v469, %v473
        %vm475 = vweird.f32 %v416
        %vm476 = vweird.f32 %v469
        %vm477 = vmor %vm475, %vm476
        %v478 = vsel %vm477, %v469, %v474
        %v479 = vrsqrt.pop %v419
        %v480 = vmul.f32 %v479, %v419
        %v481 = vmul.f32 %v480, %v479
        %v482 = vmul.f32 0.5, %v481
        %v483 = vsub.f32 1.5, %v482
        %v484 = vmul.f32 %v479, %v483
        %vm485 = vweird.f32 %v419
        %vm486 = vweird.f32 %v479
        %vm487 = vmor %vm485, %vm486
        %v488 = vsel %vm487, %v479, %v484
        %v489 = vrsqrt.pop %v422
        %v490 = vmul.f32 %v489, %v422
        %v491 = vmul.f32 %v490, %v489
        %v492 = vmul.f32 0.5, %v491
        %v493 = vsub.f32 1.5, %v492
        %v494 = vmul.f32 %v489, %v493
        %vm495 = vweird.f32 %v422
        %vm496 = vweird.f32 %v489
        %vm497 = vmor %vm495, %vm496
        %v498 = vsel %vm497, %v489, %v494
        %v499 = vrsqrt.pop %v425
        %v500 = vmul.f32 %v499, %v425
        %v501 = vmul.f32 %v500, %v499
        %v502 = vmul.f32 0.5, %v501
        %v503 = vsub.f32 1.5, %v502
        %v504 = vmul.f32 %v499, %v503
        %vm505 = vweird.f32 %v425
        %vm506 = vweird.f32 %v499
        %vm507 = vmor %vm505, %vm506
        %v508 = vsel %vm507, %v499, %v504
        %v509 = vrsqrt.pop %v428
        %v510 = vmul.f32 %v509, %v428
        %v511 = vmul.f32 %v510, %v509
        %v512 = vmul.f32 0.5, %v511
        %v513 = vsub.f32 1.5, %v512
        %v514 = vmul.f32 %v509, %v513
        %vm515 = vweird.f32 %v428
        %vm516 = vweird.f32 %v509
        %vm517 = vmor %vm515, %vm516
        %v518 = vsel %vm517, %v509, %v514
        %v519 = vrsqrt.pop %v431
        %v520 = vmul.f32 %v519, %v431
        %v521 = vmul.f32 %v520, %v519
        %v522 = vmul.f32 0.5, %v521
        %v523 = vsub.f32 1.5, %v522
        %v524 = vmul.f32 %v519, %v523
        %vm525 = vweird.f32 %v431
        %vm526 = vweird.f32 %v519
        %vm527 = vmor %vm525, %vm526
        %v528 = vsel %vm527, %v519, %v524
        %v529 = vrsqrt.pop %v434
        %v530 = vmul.f32 %v529, %v434
        %v531 = vmul.f32 %v530, %v529
        %v532 = vmul.f32 0.5, %v531
        %v533 = vsub.f32 1.5, %v532
        %v534 = vmul.f32 %v529, %v533
        %vm535 = vweird.f32 %v434
        %vm536 = vweird.f32 %v529
        %vm537 = vmor %vm535, %vm536
        %v538 = vsel %vm537, %v529, %v534
        %v539 = vrsqrt.pop %v437
        %v540 = vmul.f32 %v539, %v437
        %v541 = vmul.f32 %v540, %v539
        %v542 = vmul.f32 0.5, %v541
        %v543 = vsub.f32 1.5, %v542
        %v544 = vmul.f32 %v539, %v543
        %vm545 = vweird.f32 %v437
        %vm546 = vweird.f32 %v539
        %vm547 = vmor %vm545, %vm546
        %v548 = vsel %vm547, %v539, %v544
        %v549 = vrsqrt.pop %v440
        %v550 = vmul.f32 %v549, %v440
        %v551 = vmul.f32 %v550, %v549
        %v552 = vmul.f32 0.5, %v551
        %v553 = vsub.f32 1.5, %v552
        %v554 = vmul.f32 %v549, %v553
        %vm555 = vweird.f32 %v440
        %vm556 = vweird.f32 %v549
        %vm557 = vmor %vm555, %vm556
        %v558 = vsel %vm557, %v549, %v554
        %v559 = vrsqrt.pop %v443
        %v560 = vmul.f32 %v559, %v443
        %v561 = vmul.f32 %v560, %v559
        %v562 = vmul.f32 0.5, %v561
        %v563 = vsub.f32 1.5, %v562
        %v564 = vmul.f32 %v559, %v563
        %vm565 = vweird.f32 %v443
        %vm566 = vweird.f32 %v559
        %vm567 = vmor %vm565, %vm566
        %v568 = vsel %vm567, %v559, %v564
        %v569 = vrsqrt.pop %v446
        %v570 = vmul.f32 %v569, %v446
        %v571 = vmul.f32 %v570, %v569
        %v572 = vmul.f32 0.5, %v571
        %v573 = vsub.f32 1.5, %v572
        %v574 = vmul.f32 %v569, %v573
        %vm575 = vweird.f32 %v446
        %vm576 = vweird.f32 %v569
        %vm577 = vmor %vm575, %vm576
        %v578 = vsel %vm577, %v569, %v574
        %v579 = vrsqrt.pop %v449
        %v580 = vmul.f32 %v579, %v449
        %v581 = vmul.f32 %v580, %v579
        %v582 = vmul.f32 0.5, %v581
        %v583 = vsub.f32 1.5, %v582
        %v584 = vmul.f32 %v579, %v583
        %vm585 = vweird.f32 %v449
        %vm586 = vweird.f32 %v579
        %vm587 = vmor %vm585, %vm586
        %v588 = vsel %vm587, %v579, %v584
        %v589 = vrsqrt.pop %v452
        %v590 = vmul.f32 %v589, %v452
        %v591 = vmul.f32 %v590, %v589
        %v592 = vmul.f32 0.5, %v591
        %v593 = vsub.f32 1.5, %v592
        %v594 = vmul.f32 %v589, %v593
        %vm595 = vweird.f32 %v452
        %vm596 = vweird.f32 %v589
        %vm597 = vmor %vm595, %vm596
        %v598 = vsel %vm597, %v589, %v594
        %v599 = vrsqrt.pop %v455
        %v600 = vmul.f32 %v599, %v455
        %v601 = vmul.f32 %v600, %v599
        %v602 = vmul.f32 0.5, %v601
        %v603 = vsub.f32 1.5, %v602
        %v604 = vmul.f32 %v599, %v603
        %vm605 = vweird.f32 %v455
        %vm606 = vweird.f32 %v599
        %vm607 = vmor %vm605, %vm606
        %v608 = vsel %vm607, %v599, %v604
        %v609 = vrsqrt.pop %v458
        %v610 = vmul.f32 %v609, %v458
        %v611 = vmul.f32 %v610, %v609
        %v612 = vmul.f32 0.5, %v611
        %v613 = vsub.f32 1.5, %v612
        %v614 = vmul.f32 %v609, %v613
        %vm615 = vweird.f32 %v458
        %vm616 = vweird.f32 %v609
        %vm617 = vmor %vm615, %vm616
        %v618 = vsel %vm617, %v609, %v614
        %v619 = vmul.f32 %v379, %v468
        %v620 = vmul.f32 %v380, %v478
        %v621 = vmul.f32 %v381, %v488
        %v622 = vmul.f32 %v382, %v498
        %v623 = vmul.f32 %v383, %v508
        %v624 = vmul.f32 %v384, %v518
        %v625 = vmul.f32 %v385, %v528
        %v626 = vmul.f32 %v386, %v538
        %v627 = vmul.f32 %v387, %v548
        %v628 = vmul.f32 %v388, %v558
        %v629 = vmul.f32 %v389, %v568
        %v630 = vmul.f32 %v390, %v578
        %v631 = vmul.f32 %v391, %v588
        %v632 = vmul.f32 %v392, %v598
        %v633 = vmul.f32 %v393, %v608
        %v634 = vmul.f32 %v394, %v618
        %635 = vst.msk [vmem:[%s172] sm:$0xff] %vm330, %v619
        %636 = vst.msk [vmem:[%s172 + $0x8] sm:$0xff] %vm330, %v620
        %637 = vst.msk [vmem:[%s172 + $0x10] sm:$0xff] %vm330, %v621
        %638 = vst.msk [vmem:[%s172 + $0x18] sm:$0xff] %vm330, %v622
        %639 = vst.msk [vmem:[%s172 + $0x20] sm:$0xff] %vm330, %v623
        %640 = vst.msk [vmem:[%s172 + $0x28] sm:$0xff] %vm330, %v624
        %641 = vst.msk [vmem:[%s172 + $0x30] sm:$0xff] %vm330, %v625
        %642 = vst.msk [vmem:[%s172 + $0x38] sm:$0xff] %vm330, %v626
        %643 = vst.msk [vmem:[%s172 + $0x40] sm:$0xff] %vm330, %v627
        %644 = vst.msk [vmem:[%s172 + $0x48] sm:$0xff] %vm330, %v628
        %645 = vst.msk [vmem:[%s172 + $0x50] sm:$0xff] %vm330, %v629
        %646 = vst.msk [vmem:[%s172 + $0x58] sm:$0xff] %vm330, %v630
        %647 = vst.msk [vmem:[%s172 + $0x60] sm:$0xff] %vm330, %v631
        %648 = vst.msk [vmem:[%s172 + $0x68] sm:$0xff] %vm330, %v632
        %649 = vst.msk [vmem:[%s172 + $0x70] sm:$0xff] %vm330, %v633
        %650 = vst.msk [vmem:[%s172 + $0x78] sm:$0xff] %vm330, %v634
        %s651 = sand.u32 %s90, 1
        %s652 = sand.u32 %s90, 1
        %s653 = smul.addr %s652, 128
        %s654 = scalar_lea.vmem [#allocation2], %s653
        // Predicated region
        $region33: #{tpu_custom_call.1} parent=31 // pred_check
          %p655 = pneg %p100
        $region34: #{tpu_custom_call.1} parent=31 // pred_check_branch
          %657 = sbr.rel (%p655) target = $region36
        $region35: #{tpu_custom_call.1} parent=31 // pred_region
          %s658 = smul.u32 16, %s14
          %s659 = ssub.s32 38, %s658
          %p660 = scmp.lt.s32.totalorder %s659, 16
          %s661 = scalar_select %p660, %s659, 16
          %s662 = smul.u32 8, %s661
          %p663 = scmp.ne.s32.totalorder 0, %s662
          %s664 = smul.addr %s658, 8
          %s665 = scalar_lea.vmem %s3, %s664
          // Predicated region
          $region37: #{tpu_custom_call.1} parent=35 // pred_check
            %p666 = pneg %p663
          $region38: #{tpu_custom_call.1} parent=35 // pred_check_branch
            %668 = sbr.rel (%p666) target = $region40
          $region39: #{tpu_custom_call.1} parent=35 // pred_region
            // Predicated region
            $region41: #{tpu_custom_call.1} parent=39 // pred_check
              _
            $region42: #{tpu_custom_call.1} parent=39 // pred_check_branch
              %670 = sbr.rel (0) target = $region44
            $region43: #{tpu_custom_call.1} parent=39 // pred_region
              // Predicated region
              $region63: #{tpu_custom_call.1} parent=43 // pred_check
                _
              $region64: #{tpu_custom_call.1} parent=43 // pred_check_branch
                %750 = sbr.rel (0) target = $region66
              $region65: #{tpu_custom_call.1} parent=43 // pred_region
                %s751 = sshrl.u32 %s661, 4
                // While loop
                $region67: #{tpu_custom_call.1} parent=65 // loop_pre_header
                  _
                $region68: #{tpu_custom_call.1} parent=65 // loop_header
                  %s753 = sphi 0, %s755
                  %p754 = scmp.ge.s32.totalorder %s753, %s751
                  %s758 = sphi 0, %s795
                  %s759 = sphi %s654, %s798
                  %s760 = sphi %s665, %s799
                $region69: #{tpu_custom_call.1} parent=65 // loop_header_branch
                  %757 = sbr.rel (%p754) target = $region73
                $region70: #{tpu_custom_call.1} parent=65 // loop_body
                  %v761 = vld [vmem:[%s759] sm:$0xff]
                  %762 = vst [vmem:[%s760] sm:$0xff] %v761
                  %v763 = vld [vmem:[%s759 + $0x8] sm:$0xff]
                  %764 = vst [vmem:[%s760 + $0x8] sm:$0xff] %v763
                  %v765 = vld [vmem:[%s759 + $0x10] sm:$0xff]
                  %766 = vst [vmem:[%s760 + $0x10] sm:$0xff] %v765
                  %v767 = vld [vmem:[%s759 + $0x18] sm:$0xff]
                  %768 = vst [vmem:[%s760 + $0x18] sm:$0xff] %v767
                  %v769 = vld [vmem:[%s759 + $0x20] sm:$0xff]
                  %770 = vst [vmem:[%s760 + $0x20] sm:$0xff] %v769
                  %v771 = vld [vmem:[%s759 + $0x28] sm:$0xff]
                  %772 = vst [vmem:[%s760 + $0x28] sm:$0xff] %v771
                  %v773 = vld [vmem:[%s759 + $0x30] sm:$0xff]
                  %774 = vst [vmem:[%s760 + $0x30] sm:$0xff] %v773
                  %v775 = vld [vmem:[%s759 + $0x38] sm:$0xff]
                  %776 = vst [vmem:[%s760 + $0x38] sm:$0xff] %v775
                  %v777 = vld [vmem:[%s759 + $0x40] sm:$0xff]
                  %778 = vst [vmem:[%s760 + $0x40] sm:$0xff] %v777
                  %v779 = vld [vmem:[%s759 + $0x48] sm:$0xff]
                  %780 = vst [vmem:[%s760 + $0x48] sm:$0xff] %v779
                  %v781 = vld [vmem:[%s759 + $0x50] sm:$0xff]
                  %782 = vst [vmem:[%s760 + $0x50] sm:$0xff] %v781
                  %v783 = vld [vmem:[%s759 + $0x58] sm:$0xff]
                  %784 = vst [vmem:[%s760 + $0x58] sm:$0xff] %v783
                  %v785 = vld [vmem:[%s759 + $0x60] sm:$0xff]
                  %786 = vst [vmem:[%s760 + $0x60] sm:$0xff] %v785
                  %v787 = vld [vmem:[%s759 + $0x68] sm:$0xff]
                  %788 = vst [vmem:[%s760 + $0x68] sm:$0xff] %v787
                  %v789 = vld [vmem:[%s759 + $0x70] sm:$0xff]
                  %790 = vst [vmem:[%s760 + $0x70] sm:$0xff] %v789
                  %v791 = vld [vmem:[%s759 + $0x78] sm:$0xff]
                  %792 = vst [vmem:[%s760 + $0x78] sm:$0xff] %v791
                  %s793 = sadd.s32 1, %s758
                  %p794 = scmp.ge.s32.totalorder %s793, %s751
                  %s795 = scalar_select %p794, 0, %s793
                  %s796 = smul.u32 %s795, 128
                  %s797 = smul.u32 %s795, 128
                  %s798 = scalar_lea.vmem %s654, %s796 [#allocation2]
                  %s799 = scalar_lea.vmem %s665, %s797
                $region71: #{tpu_custom_call.1} parent=65 // loop_footer
                  %s755 = sadd.s32 %s753, 1
                $region72: #{tpu_custom_call.1} parent=65 // loop_footer_branch
                  %752 = sbr.rel target = $region68
                $region73: #{tpu_custom_call.1} parent=65 // loop_exit
                  _
                %s800 = sshrl.u32 %s661, 4
                %s801 = sand.u32 %s661, 15
                %s802 = smul.u32 %s800, 16
                %s803 = smul.u32 8, %s802
                %s804 = scalar_lea.vmem %s654, %s803 [#allocation2]
                %s805 = smul.u32 8, %s802
                %s806 = scalar_lea.vmem %s665, %s805
                // While loop
                $region74: #{tpu_custom_call.1} parent=65 // loop_pre_header
                  _
                $region75: #{tpu_custom_call.1} parent=65 // loop_header
                  %s808 = sphi 0, %s810
                  %p809 = scmp.ge.s32.totalorder %s808, %s801
                  %s813 = sphi 0, %s820
                  %s814 = sphi %s804, %s823
                  %s815 = sphi %s806, %s824
                $region76: #{tpu_custom_call.1} parent=65 // loop_header_branch
                  %812 = sbr.rel (%p809) target = $region80
                $region77: #{tpu_custom_call.1} parent=65 // loop_body
                  %v816 = vld [vmem:[%s814] sm:$0xff]
                  %817 = vst [vmem:[%s815] sm:$0xff] %v816
                  %s818 = sadd.s32 1, %s813
                  %p819 = scmp.ge.s32.totalorder %s818, %s801
                  %s820 = scalar_select %p819, 0, %s818
                  %s821 = smul.u32 %s820, 8
                  %s822 = smul.u32 %s820, 8
                  %s823 = scalar_lea.vmem %s804, %s821 [#allocation2]
                  %s824 = scalar_lea.vmem %s806, %s822
                $region78: #{tpu_custom_call.1} parent=65 // loop_footer
                  %s810 = sadd.s32 %s808, 1
                $region79: #{tpu_custom_call.1} parent=65 // loop_footer_branch
                  %807 = sbr.rel target = $region75
                $region80: #{tpu_custom_call.1} parent=65 // loop_exit
                  _
              $region66: #{tpu_custom_call.1} parent=43 // pred_fallthru
                _
              // Predicated region
              $region81: #{tpu_custom_call.1} parent=43 // pred_check
                _
              $region82: #{tpu_custom_call.1} parent=43 // pred_check_branch
                %826 = sbr.rel target = $region84
              $region83: #{tpu_custom_call.1} parent=43 // pred_region
                _
              $region84: #{tpu_custom_call.1} parent=43 // pred_fallthru
                _
            $region44: #{tpu_custom_call.1} parent=39 // pred_fallthru
              _
            // Predicated region
            $region45: #{tpu_custom_call.1} parent=39 // pred_check
              _
            $region46: #{tpu_custom_call.1} parent=39 // pred_check_branch
              %672 = sbr.rel target = $region48
            $region47: #{tpu_custom_call.1} parent=39 // pred_region
              %s674 = ssub.s32 256, 1
              %s675 = sshrl.u32 %s661, 4
              // While loop
              $region49: #{tpu_custom_call.1} parent=47 // loop_pre_header
                _
              $region50: #{tpu_custom_call.1} parent=47 // loop_header
                %s677 = sphi 0, %s679
                %p678 = scmp.ge.s32.totalorder %s677, %s675
                %s682 = sphi 0, %s719
                %s683 = sphi %s654, %s722
                %s684 = sphi %s665, %s723
              $region51: #{tpu_custom_call.1} parent=47 // loop_header_branch
                %681 = sbr.rel (%p678) target = $region55
              $region52: #{tpu_custom_call.1} parent=47 // loop_body
                %v685 = vld [vmem:[%s683] sm:%s674]
                %686 = vst [vmem:[%s684] sm:%s674] %v685
                %v687 = vld [vmem:[%s683 + $0x8] sm:%s674]
                %688 = vst [vmem:[%s684 + $0x8] sm:%s674] %v687
                %v689 = vld [vmem:[%s683 + $0x10] sm:%s674]
                %690 = vst [vmem:[%s684 + $0x10] sm:%s674] %v689
                %v691 = vld [vmem:[%s683 + $0x18] sm:%s674]
                %692 = vst [vmem:[%s684 + $0x18] sm:%s674] %v691
                %v693 = vld [vmem:[%s683 + $0x20] sm:%s674]
                %694 = vst [vmem:[%s684 + $0x20] sm:%s674] %v693
                %v695 = vld [vmem:[%s683 + $0x28] sm:%s674]
                %696 = vst [vmem:[%s684 + $0x28] sm:%s674] %v695
                %v697 = vld [vmem:[%s683 + $0x30] sm:%s674]
                %698 = vst [vmem:[%s684 + $0x30] sm:%s674] %v697
                %v699 = vld [vmem:[%s683 + $0x38] sm:%s674]
                %700 = vst [vmem:[%s684 + $0x38] sm:%s674] %v699
                %v701 = vld [vmem:[%s683 + $0x40] sm:%s674]
                %702 = vst [vmem:[%s684 + $0x40] sm:%s674] %v701
                %v703 = vld [vmem:[%s683 + $0x48] sm:%s674]
                %704 = vst [vmem:[%s684 + $0x48] sm:%s674] %v703
                %v705 = vld [vmem:[%s683 + $0x50] sm:%s674]
                %706 = vst [vmem:[%s684 + $0x50] sm:%s674] %v705
                %v707 = vld [vmem:[%s683 + $0x58] sm:%s674]
                %708 = vst [vmem:[%s684 + $0x58] sm:%s674] %v707
                %v709 = vld [vmem:[%s683 + $0x60] sm:%s674]
                %710 = vst [vmem:[%s684 + $0x60] sm:%s674] %v709
                %v711 = vld [vmem:[%s683 + $0x68] sm:%s674]
                %712 = vst [vmem:[%s684 + $0x68] sm:%s674] %v711
                %v713 = vld [vmem:[%s683 + $0x70] sm:%s674]
                %714 = vst [vmem:[%s684 + $0x70] sm:%s674] %v713
                %v715 = vld [vmem:[%s683 + $0x78] sm:%s674]
                %716 = vst [vmem:[%s684 + $0x78] sm:%s674] %v715
                %s717 = sadd.s32 1, %s682
                %p718 = scmp.ge.s32.totalorder %s717, %s675
                %s719 = scalar_select %p718, 0, %s717
                %s720 = smul.u32 %s719, 128
                %s721 = smul.u32 %s719, 128
                %s722 = scalar_lea.vmem %s654, %s720 [#allocation2]
                %s723 = scalar_lea.vmem %s665, %s721
              $region53: #{tpu_custom_call.1} parent=47 // loop_footer
                %s679 = sadd.s32 %s677, 1
              $region54: #{tpu_custom_call.1} parent=47 // loop_footer_branch
                %676 = sbr.rel target = $region50
              $region55: #{tpu_custom_call.1} parent=47 // loop_exit
                _
              %s724 = sshrl.u32 %s661, 4
              %s725 = sand.u32 %s661, 15
              %s726 = smul.u32 %s724, 16
              %s727 = smul.u32 8, %s726
              %s728 = scalar_lea.vmem %s654, %s727 [#allocation2]
              %s729 = smul.u32 8, %s726
              %s730 = scalar_lea.vmem %s665, %s729
              // While loop
              $region56: #{tpu_custom_call.1} parent=47 // loop_pre_header
                _
              $region57: #{tpu_custom_call.1} parent=47 // loop_header
                %s732 = sphi 0, %s734
                %p733 = scmp.ge.s32.totalorder %s732, %s725
                %s737 = sphi 0, %s744
                %s738 = sphi %s728, %s747
                %s739 = sphi %s730, %s748
              $region58: #{tpu_custom_call.1} parent=47 // loop_header_branch
                %736 = sbr.rel (%p733) target = $region62
              $region59: #{tpu_custom_call.1} parent=47 // loop_body
                %v740 = vld [vmem:[%s738] sm:%s674]
                %741 = vst [vmem:[%s739] sm:%s674] %v740
                %s742 = sadd.s32 1, %s737
                %p743 = scmp.ge.s32.totalorder %s742, %s725
                %s744 = scalar_select %p743, 0, %s742
                %s745 = smul.u32 %s744, 8
                %s746 = smul.u32 %s744, 8
                %s747 = scalar_lea.vmem %s728, %s745 [#allocation2]
                %s748 = scalar_lea.vmem %s730, %s746
              $region60: #{tpu_custom_call.1} parent=47 // loop_footer
                %s734 = sadd.s32 %s732, 1
              $region61: #{tpu_custom_call.1} parent=47 // loop_footer_branch
                %731 = sbr.rel target = $region57
              $region62: #{tpu_custom_call.1} parent=47 // loop_exit
                _
            $region48: #{tpu_custom_call.1} parent=39 // pred_fallthru
              _
          $region40: #{tpu_custom_call.1} parent=35 // pred_fallthru
            _
          %827 = vnop
        $region36: #{tpu_custom_call.1} parent=31 // pred_fallthru
          _
      $region32: #{tpu_custom_call.1} parent=5 // pred_fallthru
        _
      %p828 = scmp.le.s32.totalorder 2, %s9
      // Predicated region
      $region85: #{tpu_custom_call.1} parent=5 // pred_check
        %p829 = pneg %p828
      $region86: #{tpu_custom_call.1} parent=5 // pred_check_branch
        %831 = sbr.rel (%p829) target = $region88
      $region87: #{tpu_custom_call.1} parent=5 // pred_region
        %s832 = ssub.s32 %s9, 2
        // Predicated region
        $region89: #{tpu_custom_call.1} parent=87 // pred_check
          %p833 = pneg %p106
        $region90: #{tpu_custom_call.1} parent=87 // pred_check_branch
          %835 = sbr.rel (%p833) target = $region92
        $region91: #{tpu_custom_call.1} parent=87 // pred_region
          %s836 = sand.u32 %s91, 1
          %s837 = sand.u32 %s91, 1
          %s838 = smul.addr %s837, 128
          %s839 = scalar_lea.vmem [#allocation2], %s838
        $region92: #{tpu_custom_call.1} parent=87 // pred_fallthru
          _
      $region88: #{tpu_custom_call.1} parent=5 // pred_fallthru
        _
    $region6: #{tpu_custom_call.1} parent=1 // loop_footer
      %s13 = sadd.s32 1, %s9
    $region7: #{tpu_custom_call.1} parent=1 // loop_footer_branch
      %8 = sbr.rel target = $region3
    $region8: #{tpu_custom_call.1} parent=1 // loop_exit
      _

</llo_original>
